<compile_context>
chip_gen: v7x
topology: tpu7x:2x2x1
jax: 0.10.0
libtpu: 0.0.40
codegen_flags: <defaults>
</compile_context>

<pallas_src>
import functools

import jax
import jax.numpy as jnp
from jax.experimental import pallas as pl
from jax.experimental.pallas import tpu as pltpu

_DEF_MAX_ROWS = 8192            # 8192 rows x 128 lanes x 4 B = 4 MiB f32 per input/step
_VMEM_LIMIT = 32 * 1024 * 1024  # double-buffered 2 x 2 x 4 MiB inputs fit with slack
_NEG_PAD = -1.0e4               # sigmoid(-1e4) == 0 exactly in f32


def _round_up(x, m):
    return (x + m - 1) // m * m


def _fold_rows(x):
    """(R, L) -> (min(R, 8), L): pairwise-tree sum of aligned 8-row slabs (VPU adds)."""
    r = x.shape[0]
    if r <= 8:
        return x
    parts = [x[j:j + 8] for j in range(0, r, 8)]
    while len(parts) > 1:
        nxt = [parts[k] + parts[k + 1] for k in range(0, len(parts) - 1, 2)]
        if len(parts) % 2:
            nxt.append(parts[-1])
        parts = nxt
    return parts[0]


def _ftl_kernel(x_ref, t_ref, out_ref, acc_pt, acc_p, acc_t, *,
                multiclass, num_classes, block_rows, chunk_rows, total_rows,
                needs_mask, smooth, alpha, beta, gamma):
    i = pl.program_id(0)
    nsteps = pl.num_programs(0)
    lanes = num_classes if multiclass else x_ref.shape[-1]

    @pl.when(i == 0)
    def _init():
        acc_pt[...] = jnp.zeros_like(acc_pt)
        acc_p[...] = jnp.zeros_like(acc_p)
        acc_t[...] = jnp.zeros_like(acc_t)

    def chunk_partials(r0, rows_valid):
        """Row-folded partial sums over tile rows [r0, r0 + chunk_rows)."""
        x = x_ref[pl.ds(r0, chunk_rows), :].astype(jnp.float32)
        p = jax.nn.sigmoid(x)
        if multiclass:
            cls = jax.lax.broadcasted_iota(jnp.int32, (chunk_rows, num_classes), 1)
            t = (cls == t_ref[pl.ds(r0, chunk_rows), :]).astype(jnp.float32)
        else:
            t = t_ref[pl.ds(r0, chunk_rows), :].astype(jnp.float32)
        if rows_valid is not None:
            # Ragged last grid step only: rows >= rows_valid hold stale VMEM data.
            row = jax.lax.broadcasted_iota(jnp.int32, p.shape, 0) + r0
            keep = row < rows_valid
            p = jnp.where(keep, p, 0.0)
            t = jnp.where(keep, t, 0.0)
        return _fold_rows(p * t), _fold_rows(p), _fold_rows(t)

    def accumulate_tile(rows_valid):
        n_chunks = block_rows // chunk_rows
        zeros = jnp.zeros((8, lanes), jnp.float32)

        def body(c, carry):
            s_pt, s_p, s_t = carry
            r0 = c * chunk_rows
            if not isinstance(c, int):
                r0 = pl.multiple_of(r0, chunk_rows)
            c_pt, c_p, c_t = chunk_partials(r0, rows_valid)
            return s_pt + c_pt, s_p + c_p, s_t + c_t

        if n_chunks <= 4:                      # tiny tiles: unroll at trace time
            carry = (zeros, zeros, zeros)
            for c in range(n_chunks):
                carry = body(c, carry)
            s_pt, s_p, s_t = carry
        else:
            s_pt, s_p, s_t = jax.lax.fori_loop(0, n_chunks, body,
                                               (zeros, zeros, zeros))
        acc_pt[...] += s_pt
        acc_p[...] += s_p
        acc_t[...] += s_t

    if needs_mask:
        last = nsteps - 1

        @pl.when(i < last)
        def _interior():
            accumulate_tile(None)              # no mask ops in the hot loop

        @pl.when(i == last)
        def _ragged_tail():
            accumulate_tile(total_rows - i * block_rows)
    else:
        accumulate_tile(None)

    @pl.when(i == nsteps - 1)
    def _finalize():
        tp = jnp.sum(acc_pt[...], keepdims=True)        # (1, 1)
        sum_p = jnp.sum(acc_p[...], keepdims=True)
        sum_t = jnp.sum(acc_t[...], keepdims=True)
        fp = sum_p - tp                                  # sum((1-t)*p)
        fn = sum_t - tp                                  # sum(t*(1-p))
        tversky = (tp + smooth) / (tp + alpha * fp + beta * fn + smooth)
        loss = 1.0 - tversky
        if gamma != 1.0:
            # base >= 0; pow via exp/log with the zero base handled explicitly.
            safe = jnp.where(loss > 0.0, loss, 1.0)
            powed = jnp.exp(gamma * jnp.log(safe))
            loss = jnp.where(loss > 0.0, powed, 0.0)
        out_ref[...] = loss


def focal_tversky_loss(inputs, targets, smooth=1.0, alpha=0.5, beta=0.5, gamma=1.0,
                       *, max_rows_per_block=None):
    """Mirrors FocalTverskyLoss.forward(inputs, targets, smooth, alpha, beta, gamma)."""
    inputs = jnp.asarray(inputs)
    targets = jnp.asarray(targets)
    multiclass = inputs.ndim >= 2 and inputs.shape[1] > 1
    scalar_kwargs = dict(smooth=float(smooth), alpha=float(alpha),
                         beta=float(beta), gamma=float(gamma))

    if multiclass:
        if inputs.ndim != 2:
            raise ValueError(
                "multi-class path requires (N, C) logits (torch one_hot appends "
                "the class dim last; other layouts do not broadcast).")
        N, C = inputs.shape
        tgt = targets.reshape(N, 1).astype(jnp.int32)   # tiny; reshape is free
        # Cap block_n so the lane-padded VMEM footprint of one logits buffer ~4 MiB.
        lane_bytes = _round_up(C, 128) * 4
        cap = max(8, min(_DEF_MAX_ROWS, ((4 << 20) // lane_bytes) // 8 * 8))
        block_n = min(_round_up(N, 8), cap)
        if max_rows_per_block is not None:
            block_n = min(block_n, max(8, (max_rows_per_block // 8) * 8))
        grid = pl.cdiv(N, block_n)
        needs_mask = (N % block_n) != 0
        chunk = 64 if block_n % 64 == 0 else 8

        kernel = functools.partial(
            _ftl_kernel, multiclass=True, num_classes=C, block_rows=block_n,
            chunk_rows=chunk, total_rows=N, needs_mask=needs_mask, **scalar_kwargs)
        cost = pl.CostEstimate(flops=int(10 * N * C), transcendentals=int(N * C),
                               bytes_accessed=int(inputs.nbytes + tgt.nbytes + 4))
        out = pl.pallas_call(
            kernel,
            out_shape=jax.ShapeDtypeStruct((1, 1), jnp.float32),
            grid_spec=pltpu.PrefetchScalarGridSpec(
                num_scalar_prefetch=0,
                grid=(grid,),
                in_specs=[
                    pl.BlockSpec((block_n, C), lambda i: (i, 0)),   # native layout
                    pl.BlockSpec((block_n, 1), lambda i: (i, 0)),
                ],
                out_specs=pl.BlockSpec((1, 1), lambda i: (0, 0)),
                scratch_shapes=[pltpu.VMEM((8, C), jnp.float32)] * 3,
            ),
            compiler_params=pltpu.CompilerParams(
                dimension_semantics=("arbitrary",),
                vmem_limit_bytes=_VMEM_LIMIT),
            cost_estimate=cost,
        )(inputs, tgt)
    else:
        # Binary path: global sums, so flatten and go fully lane-dense.
        if targets.shape != inputs.shape:
            targets = jnp.broadcast_to(targets, inputs.shape)
        flat_x = inputs.reshape(-1)                      # free (row-major bitcast)
        flat_t = targets.reshape(-1)                     # native dtype, free
        M = flat_x.shape[0]
        pad = (-M) % 1024                                # only pads when needed
        if pad:
            flat_x = jnp.pad(flat_x, (0, pad), constant_values=_NEG_PAD)
            flat_t = jnp.pad(flat_t, (0, pad))
        rows = (M + pad) // 128                          # multiple of 8
        x2d = flat_x.reshape(rows, 128)
        t2d = flat_t.reshape(rows, 128)
        block_rows = min(rows, _DEF_MAX_ROWS)
        if max_rows_per_block is not None:
            block_rows = min(block_rows, max(8, (max_rows_per_block // 8) * 8))
        grid = pl.cdiv(rows, block_rows)
        needs_mask = (rows % block_rows) != 0
        chunk = 64 if block_rows % 64 == 0 else 8

        kernel = functools.partial(
            _ftl_kernel, multiclass=False, num_classes=None, block_rows=block_rows,
            chunk_rows=chunk, total_rows=rows, needs_mask=needs_mask, **scalar_kwargs)
        cost = pl.CostEstimate(flops=int(10 * M), transcendentals=int(M),
                               bytes_accessed=int(x2d.nbytes + t2d.nbytes + 4))
        out = pl.pallas_call(
            kernel,
            out_shape=jax.ShapeDtypeStruct((1, 1), jnp.float32),
            grid_spec=pltpu.PrefetchScalarGridSpec(
                num_scalar_prefetch=0,
                grid=(grid,),
                in_specs=[
                    pl.BlockSpec((block_rows, 128), lambda i: (i, 0)),
                    pl.BlockSpec((block_rows, 128), lambda i: (i, 0)),
                ],
                out_specs=pl.BlockSpec((1, 1), lambda i: (0, 0)),
                scratch_shapes=[pltpu.VMEM((8, 128), jnp.float32)] * 3,
            ),
            compiler_params=pltpu.CompilerParams(
                dimension_semantics=("arbitrary",),
                vmem_limit_bytes=_VMEM_LIMIT),
            cost_estimate=cost,
        )(x2d, t2d)
    return out[0, 0]


def focal_tversky_ref(inputs, targets, smooth=1.0, alpha=0.5, beta=0.5, gamma=1.0):
    """Pure-JAX reference of the PyTorch forward."""
    p = jax.nn.sigmoid(jnp.asarray(inputs, jnp.float32))
    if p.ndim >= 2 and p.shape[1] > 1:
        t = jax.nn.one_hot(jnp.asarray(targets), p.shape[1], dtype=jnp.float32)
    else:
        t = jnp.asarray(targets, jnp.float32)
    TP = jnp.sum(p * t)
    FP = jnp.sum((1.0 - t) * p)
    FN = jnp.sum(t * (1.0 - p))
    tversky = (TP + smooth) / (TP + alpha * FP + beta * FN + smooth)
    return (1.0 - tversky) ** gamma


def _check(got, want, msg):
    assert bool(jnp.allclose(got, want, rtol=1e-4, atol=1e-5)), (msg, got, want)


if __name__ == "__main__":
    key = jax.random.PRNGKey(0)
    keys = jax.random.split(key, 12)

    # ---- multi-class path: (N, C) logits, integer class targets (single block) ----
    logits = jax.random.normal(keys[0], (256, 8), dtype=jnp.float32)
    labels = jax.random.randint(keys[1], (256,), 0, 8, dtype=jnp.int32)
    got = focal_tversky_loss(logits, labels)
    jax.block_until_ready(got)
    _check(got, focal_tversky_ref(logits, labels), "multiclass single block")

    # multi-class, multi-step grid + ragged last block (exercises the mask branch)
    logits2 = jax.random.normal(keys[2], (200, 8), dtype=jnp.float32)
    labels2 = jax.random.randint(keys[3], (200,), 0, 8, dtype=jnp.int32)
    got = focal_tversky_loss(logits2, labels2, max_rows_per_block=64)
    jax.block_until_ready(got)
    _check(got, focal_tversky_ref(logits2, labels2), "multiclass ragged grid")

    # ---- binary path (inputs.size(1) == 1): NCHW segmentation logits ----
    x = jax.random.normal(keys[4], (2, 1, 16, 16), dtype=jnp.float32)
    t = (jax.random.uniform(keys[5], (2, 1, 16, 16)) > 0.5).astype(jnp.float32)
    got = focal_tversky_loss(x, t, gamma=2.0)
    jax.block_until_ready(got)
    _check(got, focal_tversky_ref(x, t, gamma=2.0), "binary gamma=2")

    # binary, numel not a multiple of 1024 (exercises the -1e4 logit padding)
    x2 = jax.random.normal(keys[6], (2, 1, 9, 13), dtype=jnp.float32)
    t2 = (jax.random.uniform(keys[7], (2, 1, 9, 13)) > 0.5).astype(jnp.float32)
    got = focal_tversky_loss(x2, t2)
    jax.block_until_ready(got)
    _check(got, focal_tversky_ref(x2, t2), "binary ragged numel")

    # binary, multi-step grid + ragged last block (accumulators + mask branch)
    x3 = jax.random.normal(keys[8], (2, 1, 48, 48), dtype=jnp.float32)
    t3 = (jax.random.uniform(keys[9], (2, 1, 48, 48)) > 0.5).astype(jnp.float32)
    got = focal_tversky_loss(x3, t3, max_rows_per_block=16)
    jax.block_until_ready(got)
    _check(got, focal_tversky_ref(x3, t3), "binary multi-step ragged")

    # binary, narrow dtypes streamed end-to-end (cast happens inside the kernel)
    x4 = jax.random.normal(keys[10], (2, 1, 64, 64), dtype=jnp.bfloat16)
    t4 = (jax.random.uniform(keys[11], (2, 1, 64, 64)) > 0.5).astype(jnp.bfloat16)
    got = focal_tversky_loss(x4, t4)
    jax.block_until_ready(got)
    _check(got, focal_tversky_ref(x4, t4), "binary bf16 inputs/targets")

    print("KERNEL_OK")
</pallas_src>

<mosaic_0001>
module attributes {stable_mosaic.version = 11 : i64} {
  func.func @_ftl_kernel(%arg0: i32, %arg1: memref<256x8xf32, #tpu.memory_space<vmem>>, %arg2: memref<256x1xi32, #tpu.memory_space<vmem>>, %arg3: memref<1x1xf32, #tpu.memory_space<vmem>>, %arg4: memref<8x8xf32, #tpu.memory_space<vmem>>, %arg5: memref<8x8xf32, #tpu.memory_space<vmem>>, %arg6: memref<8x8xf32, #tpu.memory_space<vmem>>) attributes {dimension_semantics = [#tpu.dimension_semantics<arbitrary>], iteration_bounds = array<i64: 1>, scalar_prefetch = 0 : i64, scratch_operands = 3 : i64, tpu.core_type = #tpu.core_type<tc>, window_params = [{transform_indices = @transform_0, window_bounds = array<i64: 256, 8>}, {transform_indices = @transform_1, window_bounds = array<i64: 256, 1>}, {pipeline_mode = #tpu.pipeline_mode<synchronous>, transform_indices = @transform_2, window_bounds = array<i64: 1, 1>}]} {
    %c0_i32 = arith.constant 0 : i32
    %0 = arith.cmpi eq, %arg0, %c0_i32 : i32
    %1 = arith.extui %0 : i1 to i32
    %c0_i32_0 = arith.constant 0 : i32
    %2 = arith.cmpi ne, %1, %c0_i32_0 : i32
    scf.if %2 {
      %cst_31 = arith.constant 0.000000e+00 : f32
      %260 = vector.broadcast %cst_31 : f32 to vector<8x8xf32>
      %c0_32 = arith.constant 0 : index
      %c0_33 = arith.constant 0 : index
      %261 = vector.load %arg4[%c0_32, %c0_33] : memref<8x8xf32, #tpu.memory_space<vmem>>, vector<8x8xf32>
      tpu.vector_store %arg4[%c0_32, %c0_33], %260 {strides = array<i32>} : memref<8x8xf32, #tpu.memory_space<vmem>>, vector<8x8xf32>,
      %cst_34 = arith.constant 0.000000e+00 : f32
      %262 = vector.broadcast %cst_34 : f32 to vector<8x8xf32>
      %c0_35 = arith.constant 0 : index
      %c0_36 = arith.constant 0 : index
      %263 = vector.load %arg5[%c0_35, %c0_36] : memref<8x8xf32, #tpu.memory_space<vmem>>, vector<8x8xf32>
      tpu.vector_store %arg5[%c0_35, %c0_36], %262 {strides = array<i32>} : memref<8x8xf32, #tpu.memory_space<vmem>>, vector<8x8xf32>,
      %cst_37 = arith.constant 0.000000e+00 : f32
      %264 = vector.broadcast %cst_37 : f32 to vector<8x8xf32>
      %c0_38 = arith.constant 0 : index
      %c0_39 = arith.constant 0 : index
      %265 = vector.load %arg6[%c0_38, %c0_39] : memref<8x8xf32, #tpu.memory_space<vmem>>, vector<8x8xf32>
      tpu.vector_store %arg6[%c0_38, %c0_39], %264 {strides = array<i32>} : memref<8x8xf32, #tpu.memory_space<vmem>>, vector<8x8xf32>,
    } else {
    }
    %cst = arith.constant 0.000000e+00 : f32
    %3 = vector.broadcast %cst : f32 to vector<8x8xf32>
    %c0 = arith.constant 0 : index
    %c0_1 = arith.constant 0 : index
    %4 = vector.load %arg1[%c0, %c0_1] : memref<256x8xf32, #tpu.memory_space<vmem>>, vector<64x8xf32>
    %5 = arith.negf %4 : vector<64x8xf32>
    %6 = math.exp %5 : vector<64x8xf32>
    %cst_2 = arith.constant 1.000000e+00 : f32
    %7 = vector.broadcast %cst_2 : f32 to vector<64x8xf32>
    %8 = arith.addf %7, %6 : vector<64x8xf32>
    %9 = arith.divf %7, %8 : vector<64x8xf32>
    %10 = tpu.iota {dimensions = array<i32: 1>} : vector<64x8xi32>
    %c0_3 = arith.constant 0 : index
    %c0_4 = arith.constant 0 : index
    %11 = vector.load %arg2[%c0_3, %c0_4] : memref<256x1xi32, #tpu.memory_space<vmem>>, vector<64x1xi32>
    %12 = vector.broadcast %11 : vector<64x1xi32> to vector<64x8xi32>
    %13 = arith.cmpi eq, %10, %12 : vector<64x8xi32>
    %14 = arith.extui %13 : vector<64x8xi1> to vector<64x8xi32>
    %15 = arith.sitofp %14 : vector<64x8xi32> to vector<64x8xf32>
    %16 = arith.mulf %9, %15 : vector<64x8xf32>
    %17 = vector.extract_strided_slice %16 {offsets = [0, 0], sizes = [8, 8], strides = [1, 1]} : vector<64x8xf32> to vector<8x8xf32>
    %18 = vector.extract_strided_slice %16 {offsets = [8, 0], sizes = [8, 8], strides = [1, 1]} : vector<64x8xf32> to vector<8x8xf32>
    %19 = vector.extract_strided_slice %16 {offsets = [16, 0], sizes = [8, 8], strides = [1, 1]} : vector<64x8xf32> to vector<8x8xf32>
    %20 = vector.extract_strided_slice %16 {offsets = [24, 0], sizes = [8, 8], strides = [1, 1]} : vector<64x8xf32> to vector<8x8xf32>
    %21 = vector.extract_strided_slice %16 {offsets = [32, 0], sizes = [8, 8], strides = [1, 1]} : vector<64x8xf32> to vector<8x8xf32>
    %22 = vector.extract_strided_slice %16 {offsets = [40, 0], sizes = [8, 8], strides = [1, 1]} : vector<64x8xf32> to vector<8x8xf32>
    %23 = vector.extract_strided_slice %16 {offsets = [48, 0], sizes = [8, 8], strides = [1, 1]} : vector<64x8xf32> to vector<8x8xf32>
    %24 = vector.extract_strided_slice %16 {offsets = [56, 0], sizes = [8, 8], strides = [1, 1]} : vector<64x8xf32> to vector<8x8xf32>
    %25 = arith.addf %17, %18 : vector<8x8xf32>
    %26 = arith.addf %19, %20 : vector<8x8xf32>
    %27 = arith.addf %21, %22 : vector<8x8xf32>
    %28 = arith.addf %23, %24 : vector<8x8xf32>
    %29 = arith.addf %25, %26 : vector<8x8xf32>
    %30 = arith.addf %27, %28 : vector<8x8xf32>
    %31 = arith.addf %29, %30 : vector<8x8xf32>
    %32 = vector.extract_strided_slice %9 {offsets = [0, 0], sizes = [8, 8], strides = [1, 1]} : vector<64x8xf32> to vector<8x8xf32>
    %33 = vector.extract_strided_slice %9 {offsets = [8, 0], sizes = [8, 8], strides = [1, 1]} : vector<64x8xf32> to vector<8x8xf32>
    %34 = vector.extract_strided_slice %9 {offsets = [16, 0], sizes = [8, 8], strides = [1, 1]} : vector<64x8xf32> to vector<8x8xf32>
    %35 = vector.extract_strided_slice %9 {offsets = [24, 0], sizes = [8, 8], strides = [1, 1]} : vector<64x8xf32> to vector<8x8xf32>
    %36 = vector.extract_strided_slice %9 {offsets = [32, 0], sizes = [8, 8], strides = [1, 1]} : vector<64x8xf32> to vector<8x8xf32>
    %37 = vector.extract_strided_slice %9 {offsets = [40, 0], sizes = [8, 8], strides = [1, 1]} : vector<64x8xf32> to vector<8x8xf32>
    %38 = vector.extract_strided_slice %9 {offsets = [48, 0], sizes = [8, 8], strides = [1, 1]} : vector<64x8xf32> to vector<8x8xf32>
    %39 = vector.extract_strided_slice %9 {offsets = [56, 0], sizes = [8, 8], strides = [1, 1]} : vector<64x8xf32> to vector<8x8xf32>
    %40 = arith.addf %32, %33 : vector<8x8xf32>
    %41 = arith.addf %34, %35 : vector<8x8xf32>
    %42 = arith.addf %36, %37 : vector<8x8xf32>
    %43 = arith.addf %38, %39 : vector<8x8xf32>
    %44 = arith.addf %40, %41 : vector<8x8xf32>
    %45 = arith.addf %42, %43 : vector<8x8xf32>
    %46 = arith.addf %44, %45 : vector<8x8xf32>
    %47 = vector.extract_strided_slice %15 {offsets = [0, 0], sizes = [8, 8], strides = [1, 1]} : vector<64x8xf32> to vector<8x8xf32>
    %48 = vector.extract_strided_slice %15 {offsets = [8, 0], sizes = [8, 8], strides = [1, 1]} : vector<64x8xf32> to vector<8x8xf32>
    %49 = vector.extract_strided_slice %15 {offsets = [16, 0], sizes = [8, 8], strides = [1, 1]} : vector<64x8xf32> to vector<8x8xf32>
    %50 = vector.extract_strided_slice %15 {offsets = [24, 0], sizes = [8, 8], strides = [1, 1]} : vector<64x8xf32> to vector<8x8xf32>
    %51 = vector.extract_strided_slice %15 {offsets = [32, 0], sizes = [8, 8], strides = [1, 1]} : vector<64x8xf32> to vector<8x8xf32>
    %52 = vector.extract_strided_slice %15 {offsets = [40, 0], sizes = [8, 8], strides = [1, 1]} : vector<64x8xf32> to vector<8x8xf32>
    %53 = vector.extract_strided_slice %15 {offsets = [48, 0], sizes = [8, 8], strides = [1, 1]} : vector<64x8xf32> to vector<8x8xf32>
    %54 = vector.extract_strided_slice %15 {offsets = [56, 0], sizes = [8, 8], strides = [1, 1]} : vector<64x8xf32> to vector<8x8xf32>
    %55 = arith.addf %47, %48 : vector<8x8xf32>
    %56 = arith.addf %49, %50 : vector<8x8xf32>
    %57 = arith.addf %51, %52 : vector<8x8xf32>
    %58 = arith.addf %53, %54 : vector<8x8xf32>
    %59 = arith.addf %55, %56 : vector<8x8xf32>
    %60 = arith.addf %57, %58 : vector<8x8xf32>
    %61 = arith.addf %59, %60 : vector<8x8xf32>
    %62 = arith.addf %3, %31 : vector<8x8xf32>
    %63 = arith.addf %3, %46 : vector<8x8xf32>
    %64 = arith.addf %3, %61 : vector<8x8xf32>
    %c64 = arith.constant 64 : index
    %c0_5 = arith.constant 0 : index
    %65 = vector.load %arg1[%c64, %c0_5] : memref<256x8xf32, #tpu.memory_space<vmem>>, vector<64x8xf32>
    %66 = arith.negf %65 : vector<64x8xf32>
    %67 = math.exp %66 : vector<64x8xf32>
    %cst_6 = arith.constant 1.000000e+00 : f32
    %68 = vector.broadcast %cst_6 : f32 to vector<64x8xf32>
    %69 = arith.addf %68, %67 : vector<64x8xf32>
    %70 = arith.divf %68, %69 : vector<64x8xf32>
    %71 = tpu.iota {dimensions = array<i32: 1>} : vector<64x8xi32>
    %c64_7 = arith.constant 64 : index
    %c0_8 = arith.constant 0 : index
    %72 = vector.load %arg2[%c64_7, %c0_8] : memref<256x1xi32, #tpu.memory_space<vmem>>, vector<64x1xi32>
    %73 = vector.broadcast %72 : vector<64x1xi32> to vector<64x8xi32>
    %74 = arith.cmpi eq, %71, %73 : vector<64x8xi32>
    %75 = arith.extui %74 : vector<64x8xi1> to vector<64x8xi32>
    %76 = arith.sitofp %75 : vector<64x8xi32> to vector<64x8xf32>
    %77 = arith.mulf %70, %76 : vector<64x8xf32>
    %78 = vector.extract_strided_slice %77 {offsets = [0, 0], sizes = [8, 8], strides = [1, 1]} : vector<64x8xf32> to vector<8x8xf32>
    %79 = vector.extract_strided_slice %77 {offsets = [8, 0], sizes = [8, 8], strides = [1, 1]} : vector<64x8xf32> to vector<8x8xf32>
    %80 = vector.extract_strided_slice %77 {offsets = [16, 0], sizes = [8, 8], strides = [1, 1]} : vector<64x8xf32> to vector<8x8xf32>
    %81 = vector.extract_strided_slice %77 {offsets = [24, 0], sizes = [8, 8], strides = [1, 1]} : vector<64x8xf32> to vector<8x8xf32>
    %82 = vector.extract_strided_slice %77 {offsets = [32, 0], sizes = [8, 8], strides = [1, 1]} : vector<64x8xf32> to vector<8x8xf32>
    %83 = vector.extract_strided_slice %77 {offsets = [40, 0], sizes = [8, 8], strides = [1, 1]} : vector<64x8xf32> to vector<8x8xf32>
    %84 = vector.extract_strided_slice %77 {offsets = [48, 0], sizes = [8, 8], strides = [1, 1]} : vector<64x8xf32> to vector<8x8xf32>
    %85 = vector.extract_strided_slice %77 {offsets = [56, 0], sizes = [8, 8], strides = [1, 1]} : vector<64x8xf32> to vector<8x8xf32>
    %86 = arith.addf %78, %79 : vector<8x8xf32>
    %87 = arith.addf %80, %81 : vector<8x8xf32>
    %88 = arith.addf %82, %83 : vector<8x8xf32>
    %89 = arith.addf %84, %85 : vector<8x8xf32>
    %90 = arith.addf %86, %87 : vector<8x8xf32>
    %91 = arith.addf %88, %89 : vector<8x8xf32>
    %92 = arith.addf %90, %91 : vector<8x8xf32>
    %93 = vector.extract_strided_slice %70 {offsets = [0, 0], sizes = [8, 8], strides = [1, 1]} : vector<64x8xf32> to vector<8x8xf32>
    %94 = vector.extract_strided_slice %70 {offsets = [8, 0], sizes = [8, 8], strides = [1, 1]} : vector<64x8xf32> to vector<8x8xf32>
    %95 = vector.extract_strided_slice %70 {offsets = [16, 0], sizes = [8, 8], strides = [1, 1]} : vector<64x8xf32> to vector<8x8xf32>
    %96 = vector.extract_strided_slice %70 {offsets = [24, 0], sizes = [8, 8], strides = [1, 1]} : vector<64x8xf32> to vector<8x8xf32>
    %97 = vector.extract_strided_slice %70 {offsets = [32, 0], sizes = [8, 8], strides = [1, 1]} : vector<64x8xf32> to vector<8x8xf32>
    %98 = vector.extract_strided_slice %70 {offsets = [40, 0], sizes = [8, 8], strides = [1, 1]} : vector<64x8xf32> to vector<8x8xf32>
    %99 = vector.extract_strided_slice %70 {offsets = [48, 0], sizes = [8, 8], strides = [1, 1]} : vector<64x8xf32> to vector<8x8xf32>
    %100 = vector.extract_strided_slice %70 {offsets = [56, 0], sizes = [8, 8], strides = [1, 1]} : vector<64x8xf32> to vector<8x8xf32>
    %101 = arith.addf %93, %94 : vector<8x8xf32>
    %102 = arith.addf %95, %96 : vector<8x8xf32>
    %103 = arith.addf %97, %98 : vector<8x8xf32>
    %104 = arith.addf %99, %100 : vector<8x8xf32>
    %105 = arith.addf %101, %102 : vector<8x8xf32>
    %106 = arith.addf %103, %104 : vector<8x8xf32>
    %107 = arith.addf %105, %106 : vector<8x8xf32>
    %108 = vector.extract_strided_slice %76 {offsets = [0, 0], sizes = [8, 8], strides = [1, 1]} : vector<64x8xf32> to vector<8x8xf32>
    %109 = vector.extract_strided_slice %76 {offsets = [8, 0], sizes = [8, 8], strides = [1, 1]} : vector<64x8xf32> to vector<8x8xf32>
    %110 = vector.extract_strided_slice %76 {offsets = [16, 0], sizes = [8, 8], strides = [1, 1]} : vector<64x8xf32> to vector<8x8xf32>
    %111 = vector.extract_strided_slice %76 {offsets = [24, 0], sizes = [8, 8], strides = [1, 1]} : vector<64x8xf32> to vector<8x8xf32>
    %112 = vector.extract_strided_slice %76 {offsets = [32, 0], sizes = [8, 8], strides = [1, 1]} : vector<64x8xf32> to vector<8x8xf32>
    %113 = vector.extract_strided_slice %76 {offsets = [40, 0], sizes = [8, 8], strides = [1, 1]} : vector<64x8xf32> to vector<8x8xf32>
    %114 = vector.extract_strided_slice %76 {offsets = [48, 0], sizes = [8, 8], strides = [1, 1]} : vector<64x8xf32> to vector<8x8xf32>
    %115 = vector.extract_strided_slice %76 {offsets = [56, 0], sizes = [8, 8], strides = [1, 1]} : vector<64x8xf32> to vector<8x8xf32>
    %116 = arith.addf %108, %109 : vector<8x8xf32>
    %117 = arith.addf %110, %111 : vector<8x8xf32>
    %118 = arith.addf %112, %113 : vector<8x8xf32>
    %119 = arith.addf %114, %115 : vector<8x8xf32>
    %120 = arith.addf %116, %117 : vector<8x8xf32>
    %121 = arith.addf %118, %119 : vector<8x8xf32>
    %122 = arith.addf %120, %121 : vector<8x8xf32>
    %123 = arith.addf %62, %92 : vector<8x8xf32>
    %124 = arith.addf %63, %107 : vector<8x8xf32>
    %125 = arith.addf %64, %122 : vector<8x8xf32>
    %c128 = arith.constant 128 : index
    %c0_9 = arith.constant 0 : index
    %126 = vector.load %arg1[%c128, %c0_9] : memref<256x8xf32, #tpu.memory_space<vmem>>, vector<64x8xf32>
    %127 = arith.negf %126 : vector<64x8xf32>
    %128 = math.exp %127 : vector<64x8xf32>
    %cst_10 = arith.constant 1.000000e+00 : f32
    %129 = vector.broadcast %cst_10 : f32 to vector<64x8xf32>
    %130 = arith.addf %129, %128 : vector<64x8xf32>
    %131 = arith.divf %129, %130 : vector<64x8xf32>
    %132 = tpu.iota {dimensions = array<i32: 1>} : vector<64x8xi32>
    %c128_11 = arith.constant 128 : index
    %c0_12 = arith.constant 0 : index
    %133 = vector.load %arg2[%c128_11, %c0_12] : memref<256x1xi32, #tpu.memory_space<vmem>>, vector<64x1xi32>
    %134 = vector.broadcast %133 : vector<64x1xi32> to vector<64x8xi32>
    %135 = arith.cmpi eq, %132, %134 : vector<64x8xi32>
    %136 = arith.extui %135 : vector<64x8xi1> to vector<64x8xi32>
    %137 = arith.sitofp %136 : vector<64x8xi32> to vector<64x8xf32>
    %138 = arith.mulf %131, %137 : vector<64x8xf32>
    %139 = vector.extract_strided_slice %138 {offsets = [0, 0], sizes = [8, 8], strides = [1, 1]} : vector<64x8xf32> to vector<8x8xf32>
    %140 = vector.extract_strided_slice %138 {offsets = [8, 0], sizes = [8, 8], strides = [1, 1]} : vector<64x8xf32> to vector<8x8xf32>
    %141 = vector.extract_strided_slice %138 {offsets = [16, 0], sizes = [8, 8], strides = [1, 1]} : vector<64x8xf32> to vector<8x8xf32>
    %142 = vector.extract_strided_slice %138 {offsets = [24, 0], sizes = [8, 8], strides = [1, 1]} : vector<64x8xf32> to vector<8x8xf32>
    %143 = vector.extract_strided_slice %138 {offsets = [32, 0], sizes = [8, 8], strides = [1, 1]} : vector<64x8xf32> to vector<8x8xf32>
    %144 = vector.extract_strided_slice %138 {offsets = [40, 0], sizes = [8, 8], strides = [1, 1]} : vector<64x8xf32> to vector<8x8xf32>
    %145 = vector.extract_strided_slice %138 {offsets = [48, 0], sizes = [8, 8], strides = [1, 1]} : vector<64x8xf32> to vector<8x8xf32>
    %146 = vector.extract_strided_slice %138 {offsets = [56, 0], sizes = [8, 8], strides = [1, 1]} : vector<64x8xf32> to vector<8x8xf32>
    %147 = arith.addf %139, %140 : vector<8x8xf32>
    %148 = arith.addf %141, %142 : vector<8x8xf32>
    %149 = arith.addf %143, %144 : vector<8x8xf32>
    %150 = arith.addf %145, %146 : vector<8x8xf32>
    %151 = arith.addf %147, %148 : vector<8x8xf32>
    %152 = arith.addf %149, %150 : vector<8x8xf32>
    %153 = arith.addf %151, %152 : vector<8x8xf32>
    %154 = vector.extract_strided_slice %131 {offsets = [0, 0], sizes = [8, 8], strides = [1, 1]} : vector<64x8xf32> to vector<8x8xf32>
    %155 = vector.extract_strided_slice %131 {offsets = [8, 0], sizes = [8, 8], strides = [1, 1]} : vector<64x8xf32> to vector<8x8xf32>
    %156 = vector.extract_strided_slice %131 {offsets = [16, 0], sizes = [8, 8], strides = [1, 1]} : vector<64x8xf32> to vector<8x8xf32>
    %157 = vector.extract_strided_slice %131 {offsets = [24, 0], sizes = [8, 8], strides = [1, 1]} : vector<64x8xf32> to vector<8x8xf32>
    %158 = vector.extract_strided_slice %131 {offsets = [32, 0], sizes = [8, 8], strides = [1, 1]} : vector<64x8xf32> to vector<8x8xf32>
    %159 = vector.extract_strided_slice %131 {offsets = [40, 0], sizes = [8, 8], strides = [1, 1]} : vector<64x8xf32> to vector<8x8xf32>
    %160 = vector.extract_strided_slice %131 {offsets = [48, 0], sizes = [8, 8], strides = [1, 1]} : vector<64x8xf32> to vector<8x8xf32>
    %161 = vector.extract_strided_slice %131 {offsets = [56, 0], sizes = [8, 8], strides = [1, 1]} : vector<64x8xf32> to vector<8x8xf32>
    %162 = arith.addf %154, %155 : vector<8x8xf32>
    %163 = arith.addf %156, %157 : vector<8x8xf32>
    %164 = arith.addf %158, %159 : vector<8x8xf32>
    %165 = arith.addf %160, %161 : vector<8x8xf32>
    %166 = arith.addf %162, %163 : vector<8x8xf32>
    %167 = arith.addf %164, %165 : vector<8x8xf32>
    %168 = arith.addf %166, %167 : vector<8x8xf32>
    %169 = vector.extract_strided_slice %137 {offsets = [0, 0], sizes = [8, 8], strides = [1, 1]} : vector<64x8xf32> to vector<8x8xf32>
    %170 = vector.extract_strided_slice %137 {offsets = [8, 0], sizes = [8, 8], strides = [1, 1]} : vector<64x8xf32> to vector<8x8xf32>
    %171 = vector.extract_strided_slice %137 {offsets = [16, 0], sizes = [8, 8], strides = [1, 1]} : vector<64x8xf32> to vector<8x8xf32>
    %172 = vector.extract_strided_slice %137 {offsets = [24, 0], sizes = [8, 8], strides = [1, 1]} : vector<64x8xf32> to vector<8x8xf32>
    %173 = vector.extract_strided_slice %137 {offsets = [32, 0], sizes = [8, 8], strides = [1, 1]} : vector<64x8xf32> to vector<8x8xf32>
    %174 = vector.extract_strided_slice %137 {offsets = [40, 0], sizes = [8, 8], strides = [1, 1]} : vector<64x8xf32> to vector<8x8xf32>
    %175 = vector.extract_strided_slice %137 {offsets = [48, 0], sizes = [8, 8], strides = [1, 1]} : vector<64x8xf32> to vector<8x8xf32>
    %176 = vector.extract_strided_slice %137 {offsets = [56, 0], sizes = [8, 8], strides = [1, 1]} : vector<64x8xf32> to vector<8x8xf32>
    %177 = arith.addf %169, %170 : vector<8x8xf32>
    %178 = arith.addf %171, %172 : vector<8x8xf32>
    %179 = arith.addf %173, %174 : vector<8x8xf32>
    %180 = arith.addf %175, %176 : vector<8x8xf32>
    %181 = arith.addf %177, %178 : vector<8x8xf32>
    %182 = arith.addf %179, %180 : vector<8x8xf32>
    %183 = arith.addf %181, %182 : vector<8x8xf32>
    %184 = arith.addf %123, %153 : vector<8x8xf32>
    %185 = arith.addf %124, %168 : vector<8x8xf32>
    %186 = arith.addf %125, %183 : vector<8x8xf32>
    %c192 = arith.constant 192 : index
    %c0_13 = arith.constant 0 : index
    %187 = vector.load %arg1[%c192, %c0_13] : memref<256x8xf32, #tpu.memory_space<vmem>>, vector<64x8xf32>
    %188 = arith.negf %187 : vector<64x8xf32>
    %189 = math.exp %188 : vector<64x8xf32>
    %cst_14 = arith.constant 1.000000e+00 : f32
    %190 = vector.broadcast %cst_14 : f32 to vector<64x8xf32>
    %191 = arith.addf %190, %189 : vector<64x8xf32>
    %192 = arith.divf %190, %191 : vector<64x8xf32>
    %193 = tpu.iota {dimensions = array<i32: 1>} : vector<64x8xi32>
    %c192_15 = arith.constant 192 : index
    %c0_16 = arith.constant 0 : index
    %194 = vector.load %arg2[%c192_15, %c0_16] : memref<256x1xi32, #tpu.memory_space<vmem>>, vector<64x1xi32>
    %195 = vector.broadcast %194 : vector<64x1xi32> to vector<64x8xi32>
    %196 = arith.cmpi eq, %193, %195 : vector<64x8xi32>
    %197 = arith.extui %196 : vector<64x8xi1> to vector<64x8xi32>
    %198 = arith.sitofp %197 : vector<64x8xi32> to vector<64x8xf32>
    %199 = arith.mulf %192, %198 : vector<64x8xf32>
    %200 = vector.extract_strided_slice %199 {offsets = [0, 0], sizes = [8, 8], strides = [1, 1]} : vector<64x8xf32> to vector<8x8xf32>
    %201 = vector.extract_strided_slice %199 {offsets = [8, 0], sizes = [8, 8], strides = [1, 1]} : vector<64x8xf32> to vector<8x8xf32>
    %202 = vector.extract_strided_slice %199 {offsets = [16, 0], sizes = [8, 8], strides = [1, 1]} : vector<64x8xf32> to vector<8x8xf32>
    %203 = vector.extract_strided_slice %199 {offsets = [24, 0], sizes = [8, 8], strides = [1, 1]} : vector<64x8xf32> to vector<8x8xf32>
    %204 = vector.extract_strided_slice %199 {offsets = [32, 0], sizes = [8, 8], strides = [1, 1]} : vector<64x8xf32> to vector<8x8xf32>
    %205 = vector.extract_strided_slice %199 {offsets = [40, 0], sizes = [8, 8], strides = [1, 1]} : vector<64x8xf32> to vector<8x8xf32>
    %206 = vector.extract_strided_slice %199 {offsets = [48, 0], sizes = [8, 8], strides = [1, 1]} : vector<64x8xf32> to vector<8x8xf32>
    %207 = vector.extract_strided_slice %199 {offsets = [56, 0], sizes = [8, 8], strides = [1, 1]} : vector<64x8xf32> to vector<8x8xf32>
    %208 = arith.addf %200, %201 : vector<8x8xf32>
    %209 = arith.addf %202, %203 : vector<8x8xf32>
    %210 = arith.addf %204, %205 : vector<8x8xf32>
    %211 = arith.addf %206, %207 : vector<8x8xf32>
    %212 = arith.addf %208, %209 : vector<8x8xf32>
    %213 = arith.addf %210, %211 : vector<8x8xf32>
    %214 = arith.addf %212, %213 : vector<8x8xf32>
    %215 = vector.extract_strided_slice %192 {offsets = [0, 0], sizes = [8, 8], strides = [1, 1]} : vector<64x8xf32> to vector<8x8xf32>
    %216 = vector.extract_strided_slice %192 {offsets = [8, 0], sizes = [8, 8], strides = [1, 1]} : vector<64x8xf32> to vector<8x8xf32>
    %217 = vector.extract_strided_slice %192 {offsets = [16, 0], sizes = [8, 8], strides = [1, 1]} : vector<64x8xf32> to vector<8x8xf32>
    %218 = vector.extract_strided_slice %192 {offsets = [24, 0], sizes = [8, 8], strides = [1, 1]} : vector<64x8xf32> to vector<8x8xf32>
    %219 = vector.extract_strided_slice %192 {offsets = [32, 0], sizes = [8, 8], strides = [1, 1]} : vector<64x8xf32> to vector<8x8xf32>
    %220 = vector.extract_strided_slice %192 {offsets = [40, 0], sizes = [8, 8], strides = [1, 1]} : vector<64x8xf32> to vector<8x8xf32>
    %221 = vector.extract_strided_slice %192 {offsets = [48, 0], sizes = [8, 8], strides = [1, 1]} : vector<64x8xf32> to vector<8x8xf32>
    %222 = vector.extract_strided_slice %192 {offsets = [56, 0], sizes = [8, 8], strides = [1, 1]} : vector<64x8xf32> to vector<8x8xf32>
    %223 = arith.addf %215, %216 : vector<8x8xf32>
    %224 = arith.addf %217, %218 : vector<8x8xf32>
    %225 = arith.addf %219, %220 : vector<8x8xf32>
    %226 = arith.addf %221, %222 : vector<8x8xf32>
    %227 = arith.addf %223, %224 : vector<8x8xf32>
    %228 = arith.addf %225, %226 : vector<8x8xf32>
    %229 = arith.addf %227, %228 : vector<8x8xf32>
    %230 = vector.extract_strided_slice %198 {offsets = [0, 0], sizes = [8, 8], strides = [1, 1]} : vector<64x8xf32> to vector<8x8xf32>
    %231 = vector.extract_strided_slice %198 {offsets = [8, 0], sizes = [8, 8], strides = [1, 1]} : vector<64x8xf32> to vector<8x8xf32>
    %232 = vector.extract_strided_slice %198 {offsets = [16, 0], sizes = [8, 8], strides = [1, 1]} : vector<64x8xf32> to vector<8x8xf32>
    %233 = vector.extract_strided_slice %198 {offsets = [24, 0], sizes = [8, 8], strides = [1, 1]} : vector<64x8xf32> to vector<8x8xf32>
    %234 = vector.extract_strided_slice %198 {offsets = [32, 0], sizes = [8, 8], strides = [1, 1]} : vector<64x8xf32> to vector<8x8xf32>
    %235 = vector.extract_strided_slice %198 {offsets = [40, 0], sizes = [8, 8], strides = [1, 1]} : vector<64x8xf32> to vector<8x8xf32>
    %236 = vector.extract_strided_slice %198 {offsets = [48, 0], sizes = [8, 8], strides = [1, 1]} : vector<64x8xf32> to vector<8x8xf32>
    %237 = vector.extract_strided_slice %198 {offsets = [56, 0], sizes = [8, 8], strides = [1, 1]} : vector<64x8xf32> to vector<8x8xf32>
    %238 = arith.addf %230, %231 : vector<8x8xf32>
    %239 = arith.addf %232, %233 : vector<8x8xf32>
    %240 = arith.addf %234, %235 : vector<8x8xf32>
    %241 = arith.addf %236, %237 : vector<8x8xf32>
    %242 = arith.addf %238, %239 : vector<8x8xf32>
    %243 = arith.addf %240, %241 : vector<8x8xf32>
    %244 = arith.addf %242, %243 : vector<8x8xf32>
    %245 = arith.addf %184, %214 : vector<8x8xf32>
    %246 = arith.addf %185, %229 : vector<8x8xf32>
    %247 = arith.addf %186, %244 : vector<8x8xf32>
    %c0_17 = arith.constant 0 : index
    %c0_18 = arith.constant 0 : index
    %248 = vector.load %arg4[%c0_17, %c0_18] : memref<8x8xf32, #tpu.memory_space<vmem>>, vector<8x8xf32>
    %249 = arith.addf %248, %245 : vector<8x8xf32>
    %c0_19 = arith.constant 0 : index
    %c0_20 = arith.constant 0 : index
    %250 = vector.load %arg4[%c0_19, %c0_20] : memref<8x8xf32, #tpu.memory_space<vmem>>, vector<8x8xf32>
    tpu.vector_store %arg4[%c0_19, %c0_20], %249 {strides = array<i32>} : memref<8x8xf32, #tpu.memory_space<vmem>>, vector<8x8xf32>,
    %c0_21 = arith.constant 0 : index
    %c0_22 = arith.constant 0 : index
    %251 = vector.load %arg5[%c0_21, %c0_22] : memref<8x8xf32, #tpu.memory_space<vmem>>, vector<8x8xf32>
    %252 = arith.addf %251, %246 : vector<8x8xf32>
    %c0_23 = arith.constant 0 : index
    %c0_24 = arith.constant 0 : index
    %253 = vector.load %arg5[%c0_23, %c0_24] : memref<8x8xf32, #tpu.memory_space<vmem>>, vector<8x8xf32>
    tpu.vector_store %arg5[%c0_23, %c0_24], %252 {strides = array<i32>} : memref<8x8xf32, #tpu.memory_space<vmem>>, vector<8x8xf32>,
    %c0_25 = arith.constant 0 : index
    %c0_26 = arith.constant 0 : index
    %254 = vector.load %arg6[%c0_25, %c0_26] : memref<8x8xf32, #tpu.memory_space<vmem>>, vector<8x8xf32>
    %255 = arith.addf %254, %247 : vector<8x8xf32>
    %c0_27 = arith.constant 0 : index
    %c0_28 = arith.constant 0 : index
    %256 = vector.load %arg6[%c0_27, %c0_28] : memref<8x8xf32, #tpu.memory_space<vmem>>, vector<8x8xf32>
    tpu.vector_store %arg6[%c0_27, %c0_28], %255 {strides = array<i32>} : memref<8x8xf32, #tpu.memory_space<vmem>>, vector<8x8xf32>,
    %c0_i32_29 = arith.constant 0 : i32
    %257 = arith.cmpi eq, %arg0, %c0_i32_29 : i32
    %258 = arith.extui %257 : i1 to i32
    %c0_i32_30 = arith.constant 0 : i32
    %259 = arith.cmpi ne, %258, %c0_i32_30 : i32
    scf.if %259 {
      %c0_31 = arith.constant 0 : index
      %c0_32 = arith.constant 0 : index
      %260 = vector.load %arg4[%c0_31, %c0_32] : memref<8x8xf32, #tpu.memory_space<vmem>>, vector<8x8xf32>
      %261 = vector.shape_cast %260 : vector<8x8xf32> to vector<1x8x8xf32>
      %cst_33 = arith.constant dense<0.000000e+00> : vector<1xf32>
      %262 = vector.multi_reduction <add>, %261, %cst_33 [1, 2] : vector<1x8x8xf32> to vector<1xf32>
      %263 = vector.shape_cast %262 : vector<1xf32> to vector<1x1x1xf32>
      %264 = vector.extract %263[0, 0, 0] : f32 from vector<1x1x1xf32>
      %265 = vector.broadcast %264 : f32 to vector<1x1xf32>
      %c0_34 = arith.constant 0 : index
      %c0_35 = arith.constant 0 : index
      %266 = vector.load %arg5[%c0_34, %c0_35] : memref<8x8xf32, #tpu.memory_space<vmem>>, vector<8x8xf32>
      %267 = vector.shape_cast %266 : vector<8x8xf32> to vector<1x8x8xf32>
      %cst_36 = arith.constant dense<0.000000e+00> : vector<1xf32>
      %268 = vector.multi_reduction <add>, %267, %cst_36 [1, 2] : vector<1x8x8xf32> to vector<1xf32>
      %269 = vector.shape_cast %268 : vector<1xf32> to vector<1x1x1xf32>
      %270 = vector.extract %269[0, 0, 0] : f32 from vector<1x1x1xf32>
      %271 = vector.broadcast %270 : f32 to vector<1x1xf32>
      %c0_37 = arith.constant 0 : index
      %c0_38 = arith.constant 0 : index
      %272 = vector.load %arg6[%c0_37, %c0_38] : memref<8x8xf32, #tpu.memory_space<vmem>>, vector<8x8xf32>
      %273 = vector.shape_cast %272 : vector<8x8xf32> to vector<1x8x8xf32>
      %cst_39 = arith.constant dense<0.000000e+00> : vector<1xf32>
      %274 = vector.multi_reduction <add>, %273, %cst_39 [1, 2] : vector<1x8x8xf32> to vector<1xf32>
      %275 = vector.shape_cast %274 : vector<1xf32> to vector<1x1x1xf32>
      %276 = vector.extract %275[0, 0, 0] : f32 from vector<1x1x1xf32>
      %277 = vector.broadcast %276 : f32 to vector<1x1xf32>
      %278 = arith.subf %271, %265 : vector<1x1xf32>
      %279 = arith.subf %277, %265 : vector<1x1xf32>
      %cst_40 = arith.constant 1.000000e+00 : f32
      %280 = vector.broadcast %cst_40 : f32 to vector<1x1xf32>
      %281 = arith.addf %265, %280 : vector<1x1xf32>
      %cst_41 = arith.constant 5.000000e-01 : f32
      %282 = vector.broadcast %cst_41 : f32 to vector<1x1xf32>
      %283 = arith.mulf %282, %278 : vector<1x1xf32>
      %284 = arith.addf %265, %283 : vector<1x1xf32>
      %cst_42 = arith.constant 5.000000e-01 : f32
      %285 = vector.broadcast %cst_42 : f32 to vector<1x1xf32>
      %286 = arith.mulf %285, %279 : vector<1x1xf32>
      %287 = arith.addf %284, %286 : vector<1x1xf32>
      %cst_43 = arith.constant 1.000000e+00 : f32
      %288 = vector.broadcast %cst_43 : f32 to vector<1x1xf32>
      %289 = arith.addf %287, %288 : vector<1x1xf32>
      %290 = arith.divf %281, %289 : vector<1x1xf32>
      %cst_44 = arith.constant 1.000000e+00 : f32
      %291 = vector.broadcast %cst_44 : f32 to vector<1x1xf32>
      %292 = arith.subf %291, %290 : vector<1x1xf32>
      %c0_45 = arith.constant 0 : index
      %c0_46 = arith.constant 0 : index
      %293 = vector.load %arg3[%c0_45, %c0_46] : memref<1x1xf32, #tpu.memory_space<vmem>>, vector<1x1xf32>
      tpu.vector_store %arg3[%c0_45, %c0_46], %292 {strides = array<i32>} : memref<1x1xf32, #tpu.memory_space<vmem>>, vector<1x1xf32>,
    } else {
    }
    return
  }
  func.func @transform_0(%arg0: i32) -> (i32, i32) {
    %c0_i32 = arith.constant 0 : i32
    %c0_i32_0 = arith.constant 0 : i32
    return %arg0, %c0_i32 : i32, i32
  }
  func.func @transform_1(%arg0: i32) -> (i32, i32) {
    %c0_i32 = arith.constant 0 : i32
    %c0_i32_0 = arith.constant 0 : i32
    return %arg0, %c0_i32 : i32, i32
  }
  func.func @transform_2(%arg0: i32) -> (i32, i32) {
    %c0_i32 = arith.constant 0 : i32
    %c0_i32_0 = arith.constant 0 : i32
    %c0_i32_1 = arith.constant 0 : i32
    return %c0_i32, %c0_i32_0 : i32, i32
  }
}

</mosaic_0001>

<llo_original>
// kernel: tpu_custom_call.1
$region0: #{tpu_custom_call.1}
  #allocation0 [shape = 'u32[]', space=smem, size = 0x4, offset = 0x4, fixed_abs, tag = 'smem constant byte address 0x4 - core index']
  #allocation1 [shape = 'u32[144,128]{1,0:T(1,128)}', space=vmem, size = 0x12000, scoped, tag = 'internal scratch']
  #allocation2 [shape = 'f32[8,8]{1,0:T(8,128)}', space=vmem, size = 0x1000, scoped, tag = 'scratch operand']
  #allocation3 [shape = 'f32[8,8]{1,0:T(8,128)}', space=vmem, size = 0x1000, scoped, tag = 'scratch operand']
  #allocation4 [shape = 'f32[8,8]{1,0:T(8,128)}', space=vmem, size = 0x1000, scoped, tag = 'scratch operand']
  %s0 = inlined_call_operand.vmem [shape: f32[256,8], index: 0, kind: input, shape index: {}]
  %s1 = inlined_call_operand.vmem [shape: s32[256,1], index: 1, kind: input, shape index: {}]
  %s2 = inlined_call_operand.hbm [shape: f32[1,1], index: 2, kind: output, shape index: {}]
  %s3 = sld [smem:[#allocation0]]
  $region26: #{tpu_custom_call.1} parent=0
    _
  %s5 = ssub.s32 1, %s3
  %s6 = scalar_select 0, %s5, %s3
  $region1: #{tpu_custom_call.1} parent=0
    #allocation5 [shape = 'u8[512]{0}', space=vmem, size = 0x400, scoped, tag = 'output window, operand 0, single buffered']
    #allocation6 [shape = 's32[1]{0}', space=sflag, size = 0x4, scoped, tag = 'scoped memory for tpu_custom_call.1']
    %7 = vsyncpa [#allocation6], 0
    // Predicated region
    $region2: #{tpu_custom_call.1} parent=1 // pred_check
      _
    $region3: #{tpu_custom_call.1} parent=1 // pred_check_branch
      %9 = sbr.rel (0) target = $region5
    $region4: #{tpu_custom_call.1} parent=1 // pred_region
      _
    $region5: #{tpu_custom_call.1} parent=1 // pred_fallthru
      _
    // Predicated region
    $region6: #{tpu_custom_call.1} parent=1 // pred_check
      _
    $region7: #{tpu_custom_call.1} parent=1 // pred_check_branch
      %11 = sbr.rel (0) target = $region9
    $region8: #{tpu_custom_call.1} parent=1 // pred_region
      _
    $region9: #{tpu_custom_call.1} parent=1 // pred_fallthru
      _
    %p12 = scmp.eq.s32.totalorder 0, 0
    // Predicated region
    $region10: #{tpu_custom_call.1} parent=1 // pred_check
      %p13 = pneg %p12
    $region11: #{tpu_custom_call.1} parent=1 // pred_check_branch
      %15 = sbr.rel (%p13) target = $region13
    $region12: #{tpu_custom_call.1} parent=1 // pred_region
      %vm16 = vcmask 64512
      %17 = vst.msk [vmem:[#allocation2] sm:$0xff] %vm16, 0.0
      %18 = vst.msk [vmem:[#allocation3] sm:$0xff] %vm16, 0.0
      %19 = vst.msk [vmem:[#allocation4] sm:$0xff] %vm16, 0.0
    $region13: #{tpu_custom_call.1} parent=1 // pred_fallthru
      _
    %v20 = vld [vmem:[%s0] sm:$0xff]
    %v21 = vld [vmem:[%s0 + $0x8] sm:$0xff]
    %v22 = vld [vmem:[%s0 + $0x10] sm:$0xff]
    %v23 = vld [vmem:[%s0 + $0x18] sm:$0xff]
    %v24 = vld [vmem:[%s0 + $0x20] sm:$0xff]
    %v25 = vld [vmem:[%s0 + $0x28] sm:$0xff]
    %v26 = vld [vmem:[%s0 + $0x30] sm:$0xff]
    %v27 = vld [vmem:[%s0 + $0x38] sm:$0xff]
    %v28 = vxor.u32 %v20, 2147483648
    %v29 = vxor.u32 %v21, 2147483648
    %v30 = vxor.u32 %v22, 2147483648
    %v31 = vxor.u32 %v23, 2147483648
    %v32 = vxor.u32 %v24, 2147483648
    %v33 = vxor.u32 %v25, 2147483648
    %v34 = vxor.u32 %v26, 2147483648
    %v35 = vxor.u32 %v27, 2147483648
    %v36 = vmul.f32 %v28, 1.442695
    %v37 = vpow.pop %v36
    %v38 = vmul.f32 %v29, 1.442695
    %v39 = vpow.pop %v38
    %v40 = vmul.f32 %v30, 1.442695
    %v41 = vpow.pop %v40
    %v42 = vmul.f32 %v31, 1.442695
    %v43 = vpow.pop %v42
    %v44 = vmul.f32 %v32, 1.442695
    %v45 = vpow.pop %v44
    %v46 = vmul.f32 %v33, 1.442695
    %v47 = vpow.pop %v46
    %v48 = vmul.f32 %v34, 1.442695
    %v49 = vpow.pop %v48
    %v50 = vmul.f32 %v35, 1.442695
    %v51 = vpow.pop %v50
    %v52 = vadd.f32 %v37, 1.0
    %v53 = vadd.f32 %v39, 1.0
    %v54 = vadd.f32 %v41, 1.0
    %v55 = vadd.f32 %v43, 1.0
    %v56 = vadd.f32 %v45, 1.0
    %v57 = vadd.f32 %v47, 1.0
    %v58 = vadd.f32 %v49, 1.0
    %v59 = vadd.f32 %v51, 1.0
    %v60 = vrcp.pop %v52
    %v61 = vmul.f32 1.0, %v60
    %v62 = vrcp.pop %v53
    %v63 = vmul.f32 1.0, %v62
    %v64 = vrcp.pop %v54
    %v65 = vmul.f32 1.0, %v64
    %v66 = vrcp.pop %v55
    %v67 = vmul.f32 1.0, %v66
    %v68 = vrcp.pop %v56
    %v69 = vmul.f32 1.0, %v68
    %v70 = vrcp.pop %v57
    %v71 = vmul.f32 1.0, %v70
    %v72 = vrcp.pop %v58
    %v73 = vmul.f32 1.0, %v72
    %v74 = vrcp.pop %v59
    %v75 = vmul.f32 1.0, %v74
    %v76 = vlaneseq
    %v77 = vand.u32 %v76, 127
    %v78 = vld [vmem:[%s1] sm:$0xff]
    %v79 = vld [vmem:[%s1 + $0x8] sm:$0xff]
    %v80 = vld [vmem:[%s1 + $0x10] sm:$0xff]
    %v81 = vld [vmem:[%s1 + $0x18] sm:$0xff]
    %v82 = vld [vmem:[%s1 + $0x20] sm:$0xff]
    %v83 = vld [vmem:[%s1 + $0x28] sm:$0xff]
    %v84 = vld [vmem:[%s1 + $0x30] sm:$0xff]
    %v85 = vld [vmem:[%s1 + $0x38] sm:$0xff]
    %86 = vset.pattern.permute.xlu0 0
    %87 = vperm.xlu0 %86, %v78
    %v88 = vpop.permute.xlu0 %87
    %89 = vset.pattern.permute.xlu0 0
    %90 = vperm.xlu0 %89, %v79
    %v91 = vpop.permute.xlu0 %90
    %92 = vset.pattern.permute.xlu0 0
    %93 = vperm.xlu0 %92, %v80
    %v94 = vpop.permute.xlu0 %93
    %95 = vset.pattern.permute.xlu0 0
    %96 = vperm.xlu0 %95, %v81
    %v97 = vpop.permute.xlu0 %96
    %98 = vset.pattern.permute.xlu0 0
    %99 = vperm.xlu0 %98, %v82
    %v100 = vpop.permute.xlu0 %99
    %101 = vset.pattern.permute.xlu0 0
    %102 = vperm.xlu0 %101, %v83
    %v103 = vpop.permute.xlu0 %102
    %104 = vset.pattern.permute.xlu0 0
    %105 = vperm.xlu0 %104, %v84
    %v106 = vpop.permute.xlu0 %105
    %107 = vset.pattern.permute.xlu0 0
    %108 = vperm.xlu0 %107, %v85
    %v109 = vpop.permute.xlu0 %108
    %vm110 = vcmp.eq.s32.totalorder %v77, %v88
    %vm111 = vcmp.eq.s32.totalorder %v77, %v91
    %vm112 = vcmp.eq.s32.totalorder %v77, %v94
    %vm113 = vcmp.eq.s32.totalorder %v77, %v97
    %vm114 = vcmp.eq.s32.totalorder %v77, %v100
    %vm115 = vcmp.eq.s32.totalorder %v77, %v103
    %vm116 = vcmp.eq.s32.totalorder %v77, %v106
    %vm117 = vcmp.eq.s32.totalorder %v77, %v109
    %v118 = vsel %vm110, 1, 0
    %v119 = vsel %vm111, 1, 0
    %v120 = vsel %vm112, 1, 0
    %v121 = vsel %vm113, 1, 0
    %v122 = vsel %vm114, 1, 0
    %v123 = vsel %vm115, 1, 0
    %v124 = vsel %vm116, 1, 0
    %v125 = vsel %vm117, 1, 0
    %v126 = vcvt.s32.f32 %v118
    %v127 = vcvt.s32.f32 %v119
    %v128 = vcvt.s32.f32 %v120
    %v129 = vcvt.s32.f32 %v121
    %v130 = vcvt.s32.f32 %v122
    %v131 = vcvt.s32.f32 %v123
    %v132 = vcvt.s32.f32 %v124
    %v133 = vcvt.s32.f32 %v125
    %v134 = vmul.f32 %v61, %v126
    %v135 = vmul.f32 %v63, %v127
    %v136 = vmul.f32 %v65, %v128
    %v137 = vmul.f32 %v67, %v129
    %v138 = vmul.f32 %v69, %v130
    %v139 = vmul.f32 %v71, %v131
    %v140 = vmul.f32 %v73, %v132
    %v141 = vmul.f32 %v75, %v133
    %v142 = vadd.f32 %v134, %v135
    %v143 = vadd.f32 %v136, %v137
    %v144 = vadd.f32 %v138, %v139
    %v145 = vadd.f32 %v140, %v141
    %v146 = vadd.f32 %v142, %v143
    %v147 = vadd.f32 %v144, %v145
    %v148 = vadd.f32 %v146, %v147
    %v149 = vadd.f32 %v61, %v63
    %v150 = vadd.f32 %v65, %v67
    %v151 = vadd.f32 %v69, %v71
    %v152 = vadd.f32 %v73, %v75
    %v153 = vadd.f32 %v149, %v150
    %v154 = vadd.f32 %v151, %v152
    %v155 = vadd.f32 %v153, %v154
    %v156 = vadd.f32 %v126, %v127
    %v157 = vadd.f32 %v128, %v129
    %v158 = vadd.f32 %v130, %v131
    %v159 = vadd.f32 %v132, %v133
    %v160 = vadd.f32 %v156, %v157
    %v161 = vadd.f32 %v158, %v159
    %v162 = vadd.f32 %v160, %v161
    %v163 = vadd.f32 %v148, 0.0
    %v164 = vadd.f32 %v155, 0.0
    %v165 = vadd.f32 %v162, 0.0
    %v166 = vld [vmem:[%s0 + $0x40] sm:$0xff]
    %v167 = vld [vmem:[%s0 + $0x48] sm:$0xff]
    %v168 = vld [vmem:[%s0 + $0x50] sm:$0xff]
    %v169 = vld [vmem:[%s0 + $0x58] sm:$0xff]
    %v170 = vld [vmem:[%s0 + $0x60] sm:$0xff]
    %v171 = vld [vmem:[%s0 + $0x68] sm:$0xff]
    %v172 = vld [vmem:[%s0 + $0x70] sm:$0xff]
    %v173 = vld [vmem:[%s0 + $0x78] sm:$0xff]
    %v174 = vxor.u32 %v166, 2147483648
    %v175 = vxor.u32 %v167, 2147483648
    %v176 = vxor.u32 %v168, 2147483648
    %v177 = vxor.u32 %v169, 2147483648
    %v178 = vxor.u32 %v170, 2147483648
    %v179 = vxor.u32 %v171, 2147483648
    %v180 = vxor.u32 %v172, 2147483648
    %v181 = vxor.u32 %v173, 2147483648
    %v182 = vmul.f32 %v174, 1.442695
    %v183 = vpow.pop %v182
    %v184 = vmul.f32 %v175, 1.442695
    %v185 = vpow.pop %v184
    %v186 = vmul.f32 %v176, 1.442695
    %v187 = vpow.pop %v186
    %v188 = vmul.f32 %v177, 1.442695
    %v189 = vpow.pop %v188
    %v190 = vmul.f32 %v178, 1.442695
    %v191 = vpow.pop %v190
    %v192 = vmul.f32 %v179, 1.442695
    %v193 = vpow.pop %v192
    %v194 = vmul.f32 %v180, 1.442695
    %v195 = vpow.pop %v194
    %v196 = vmul.f32 %v181, 1.442695
    %v197 = vpow.pop %v196
    %v198 = vadd.f32 %v183, 1.0
    %v199 = vadd.f32 %v185, 1.0
    %v200 = vadd.f32 %v187, 1.0
    %v201 = vadd.f32 %v189, 1.0
    %v202 = vadd.f32 %v191, 1.0
    %v203 = vadd.f32 %v193, 1.0
    %v204 = vadd.f32 %v195, 1.0
    %v205 = vadd.f32 %v197, 1.0
    %v206 = vrcp.pop %v198
    %v207 = vmul.f32 1.0, %v206
    %v208 = vrcp.pop %v199
    %v209 = vmul.f32 1.0, %v208
    %v210 = vrcp.pop %v200
    %v211 = vmul.f32 1.0, %v210
    %v212 = vrcp.pop %v201
    %v213 = vmul.f32 1.0, %v212
    %v214 = vrcp.pop %v202
    %v215 = vmul.f32 1.0, %v214
    %v216 = vrcp.pop %v203
    %v217 = vmul.f32 1.0, %v216
    %v218 = vrcp.pop %v204
    %v219 = vmul.f32 1.0, %v218
    %v220 = vrcp.pop %v205
    %v221 = vmul.f32 1.0, %v220
    %v222 = vld [vmem:[%s1 + $0x40] sm:$0xff]
    %v223 = vld [vmem:[%s1 + $0x48] sm:$0xff]
    %v224 = vld [vmem:[%s1 + $0x50] sm:$0xff]
    %v225 = vld [vmem:[%s1 + $0x58] sm:$0xff]
    %v226 = vld [vmem:[%s1 + $0x60] sm:$0xff]
    %v227 = vld [vmem:[%s1 + $0x68] sm:$0xff]
    %v228 = vld [vmem:[%s1 + $0x70] sm:$0xff]
    %v229 = vld [vmem:[%s1 + $0x78] sm:$0xff]
    %230 = vset.pattern.permute.xlu0 0
    %231 = vperm.xlu0 %230, %v222
    %v232 = vpop.permute.xlu0 %231
    %233 = vset.pattern.permute.xlu0 0
    %234 = vperm.xlu0 %233, %v223
    %v235 = vpop.permute.xlu0 %234
    %236 = vset.pattern.permute.xlu0 0
    %237 = vperm.xlu0 %236, %v224
    %v238 = vpop.permute.xlu0 %237
    %239 = vset.pattern.permute.xlu0 0
    %240 = vperm.xlu0 %239, %v225
    %v241 = vpop.permute.xlu0 %240
    %242 = vset.pattern.permute.xlu0 0
    %243 = vperm.xlu0 %242, %v226
    %v244 = vpop.permute.xlu0 %243
    %245 = vset.pattern.permute.xlu0 0
    %246 = vperm.xlu0 %245, %v227
    %v247 = vpop.permute.xlu0 %246
    %248 = vset.pattern.permute.xlu0 0
    %249 = vperm.xlu0 %248, %v228
    %v250 = vpop.permute.xlu0 %249
    %251 = vset.pattern.permute.xlu0 0
    %252 = vperm.xlu0 %251, %v229
    %v253 = vpop.permute.xlu0 %252
    %vm254 = vcmp.eq.s32.totalorder %v77, %v232
    %vm255 = vcmp.eq.s32.totalorder %v77, %v235
    %vm256 = vcmp.eq.s32.totalorder %v77, %v238
    %vm257 = vcmp.eq.s32.totalorder %v77, %v241
    %vm258 = vcmp.eq.s32.totalorder %v77, %v244
    %vm259 = vcmp.eq.s32.totalorder %v77, %v247
    %vm260 = vcmp.eq.s32.totalorder %v77, %v250
    %vm261 = vcmp.eq.s32.totalorder %v77, %v253
    %v262 = vsel %vm254, 1, 0
    %v263 = vsel %vm255, 1, 0
    %v264 = vsel %vm256, 1, 0
    %v265 = vsel %vm257, 1, 0
    %v266 = vsel %vm258, 1, 0
    %v267 = vsel %vm259, 1, 0
    %v268 = vsel %vm260, 1, 0
    %v269 = vsel %vm261, 1, 0
    %v270 = vcvt.s32.f32 %v262
    %v271 = vcvt.s32.f32 %v263
    %v272 = vcvt.s32.f32 %v264
    %v273 = vcvt.s32.f32 %v265
    %v274 = vcvt.s32.f32 %v266
    %v275 = vcvt.s32.f32 %v267
    %v276 = vcvt.s32.f32 %v268
    %v277 = vcvt.s32.f32 %v269
    %v278 = vmul.f32 %v207, %v270
    %v279 = vmul.f32 %v209, %v271
    %v280 = vmul.f32 %v211, %v272
    %v281 = vmul.f32 %v213, %v273
    %v282 = vmul.f32 %v215, %v274
    %v283 = vmul.f32 %v217, %v275
    %v284 = vmul.f32 %v219, %v276
    %v285 = vmul.f32 %v221, %v277
    %v286 = vadd.f32 %v278, %v279
    %v287 = vadd.f32 %v280, %v281
    %v288 = vadd.f32 %v282, %v283
    %v289 = vadd.f32 %v284, %v285
    %v290 = vadd.f32 %v286, %v287
    %v291 = vadd.f32 %v288, %v289
    %v292 = vadd.f32 %v290, %v291
    %v293 = vadd.f32 %v207, %v209
    %v294 = vadd.f32 %v211, %v213
    %v295 = vadd.f32 %v215, %v217
    %v296 = vadd.f32 %v219, %v221
    %v297 = vadd.f32 %v293, %v294
    %v298 = vadd.f32 %v295, %v296
    %v299 = vadd.f32 %v297, %v298
    %v300 = vadd.f32 %v270, %v271
    %v301 = vadd.f32 %v272, %v273
    %v302 = vadd.f32 %v274, %v275
    %v303 = vadd.f32 %v276, %v277
    %v304 = vadd.f32 %v300, %v301
    %v305 = vadd.f32 %v302, %v303
    %v306 = vadd.f32 %v304, %v305
    %v307 = vadd.f32 %v163, %v292
    %v308 = vadd.f32 %v164, %v299
    %v309 = vadd.f32 %v165, %v306
    %v310 = vld [vmem:[%s0 + $0x80] sm:$0xff]
    %v311 = vld [vmem:[%s0 + $0x88] sm:$0xff]
    %v312 = vld [vmem:[%s0 + $0x90] sm:$0xff]
    %v313 = vld [vmem:[%s0 + $0x98] sm:$0xff]
    %v314 = vld [vmem:[%s0 + $0xa0] sm:$0xff]
    %v315 = vld [vmem:[%s0 + $0xa8] sm:$0xff]
    %v316 = vld [vmem:[%s0 + $0xb0] sm:$0xff]
    %v317 = vld [vmem:[%s0 + $0xb8] sm:$0xff]
    %v318 = vxor.u32 %v310, 2147483648
    %v319 = vxor.u32 %v311, 2147483648
    %v320 = vxor.u32 %v312, 2147483648
    %v321 = vxor.u32 %v313, 2147483648
    %v322 = vxor.u32 %v314, 2147483648
    %v323 = vxor.u32 %v315, 2147483648
    %v324 = vxor.u32 %v316, 2147483648
    %v325 = vxor.u32 %v317, 2147483648
    %v326 = vmul.f32 %v318, 1.442695
    %v327 = vpow.pop %v326
    %v328 = vmul.f32 %v319, 1.442695
    %v329 = vpow.pop %v328
    %v330 = vmul.f32 %v320, 1.442695
    %v331 = vpow.pop %v330
    %v332 = vmul.f32 %v321, 1.442695
    %v333 = vpow.pop %v332
    %v334 = vmul.f32 %v322, 1.442695
    %v335 = vpow.pop %v334
    %v336 = vmul.f32 %v323, 1.442695
    %v337 = vpow.pop %v336
    %v338 = vmul.f32 %v324, 1.442695
    %v339 = vpow.pop %v338
    %v340 = vmul.f32 %v325, 1.442695
    %v341 = vpow.pop %v340
    %v342 = vadd.f32 %v327, 1.0
    %v343 = vadd.f32 %v329, 1.0
    %v344 = vadd.f32 %v331, 1.0
    %v345 = vadd.f32 %v333, 1.0
    %v346 = vadd.f32 %v335, 1.0
    %v347 = vadd.f32 %v337, 1.0
    %v348 = vadd.f32 %v339, 1.0
    %v349 = vadd.f32 %v341, 1.0
    %v350 = vrcp.pop %v342
    %v351 = vmul.f32 1.0, %v350
    %v352 = vrcp.pop %v343
    %v353 = vmul.f32 1.0, %v352
    %v354 = vrcp.pop %v344
    %v355 = vmul.f32 1.0, %v354
    %v356 = vrcp.pop %v345
    %v357 = vmul.f32 1.0, %v356
    %v358 = vrcp.pop %v346
    %v359 = vmul.f32 1.0, %v358
    %v360 = vrcp.pop %v347
    %v361 = vmul.f32 1.0, %v360
    %v362 = vrcp.pop %v348
    %v363 = vmul.f32 1.0, %v362
    %v364 = vrcp.pop %v349
    %v365 = vmul.f32 1.0, %v364
    %v366 = vld [vmem:[%s1 + $0x80] sm:$0xff]
    %v367 = vld [vmem:[%s1 + $0x88] sm:$0xff]
    %v368 = vld [vmem:[%s1 + $0x90] sm:$0xff]
    %v369 = vld [vmem:[%s1 + $0x98] sm:$0xff]
    %v370 = vld [vmem:[%s1 + $0xa0] sm:$0xff]
    %v371 = vld [vmem:[%s1 + $0xa8] sm:$0xff]
    %v372 = vld [vmem:[%s1 + $0xb0] sm:$0xff]
    %v373 = vld [vmem:[%s1 + $0xb8] sm:$0xff]
    %374 = vset.pattern.permute.xlu0 0
    %375 = vperm.xlu0 %374, %v366
    %v376 = vpop.permute.xlu0 %375
    %377 = vset.pattern.permute.xlu0 0
    %378 = vperm.xlu0 %377, %v367
    %v379 = vpop.permute.xlu0 %378
    %380 = vset.pattern.permute.xlu0 0
    %381 = vperm.xlu0 %380, %v368
    %v382 = vpop.permute.xlu0 %381
    %383 = vset.pattern.permute.xlu0 0
    %384 = vperm.xlu0 %383, %v369
    %v385 = vpop.permute.xlu0 %384
    %386 = vset.pattern.permute.xlu0 0
    %387 = vperm.xlu0 %386, %v370
    %v388 = vpop.permute.xlu0 %387
    %389 = vset.pattern.permute.xlu0 0
    %390 = vperm.xlu0 %389, %v371
    %v391 = vpop.permute.xlu0 %390
    %392 = vset.pattern.permute.xlu0 0
    %393 = vperm.xlu0 %392, %v372
    %v394 = vpop.permute.xlu0 %393
    %395 = vset.pattern.permute.xlu0 0
    %396 = vperm.xlu0 %395, %v373
    %v397 = vpop.permute.xlu0 %396
    %vm398 = vcmp.eq.s32.totalorder %v77, %v376
    %vm399 = vcmp.eq.s32.totalorder %v77, %v379
    %vm400 = vcmp.eq.s32.totalorder %v77, %v382
    %vm401 = vcmp.eq.s32.totalorder %v77, %v385
    %vm402 = vcmp.eq.s32.totalorder %v77, %v388
    %vm403 = vcmp.eq.s32.totalorder %v77, %v391
    %vm404 = vcmp.eq.s32.totalorder %v77, %v394
    %vm405 = vcmp.eq.s32.totalorder %v77, %v397
    %v406 = vsel %vm398, 1, 0
    %v407 = vsel %vm399, 1, 0
    %v408 = vsel %vm400, 1, 0
    %v409 = vsel %vm401, 1, 0
    %v410 = vsel %vm402, 1, 0
    %v411 = vsel %vm403, 1, 0
    %v412 = vsel %vm404, 1, 0
    %v413 = vsel %vm405, 1, 0
    %v414 = vcvt.s32.f32 %v406
    %v415 = vcvt.s32.f32 %v407
    %v416 = vcvt.s32.f32 %v408
    %v417 = vcvt.s32.f32 %v409
    %v418 = vcvt.s32.f32 %v410
    %v419 = vcvt.s32.f32 %v411
    %v420 = vcvt.s32.f32 %v412
    %v421 = vcvt.s32.f32 %v413
    %v422 = vmul.f32 %v351, %v414
    %v423 = vmul.f32 %v353, %v415
    %v424 = vmul.f32 %v355, %v416
    %v425 = vmul.f32 %v357, %v417
    %v426 = vmul.f32 %v359, %v418
    %v427 = vmul.f32 %v361, %v419
    %v428 = vmul.f32 %v363, %v420
    %v429 = vmul.f32 %v365, %v421
    %v430 = vadd.f32 %v422, %v423
    %v431 = vadd.f32 %v424, %v425
    %v432 = vadd.f32 %v426, %v427
    %v433 = vadd.f32 %v428, %v429
    %v434 = vadd.f32 %v430, %v431
    %v435 = vadd.f32 %v432, %v433
    %v436 = vadd.f32 %v434, %v435
    %v437 = vadd.f32 %v351, %v353
    %v438 = vadd.f32 %v355, %v357
    %v439 = vadd.f32 %v359, %v361
    %v440 = vadd.f32 %v363, %v365
    %v441 = vadd.f32 %v437, %v438
    %v442 = vadd.f32 %v439, %v440
    %v443 = vadd.f32 %v441, %v442
    %v444 = vadd.f32 %v414, %v415
    %v445 = vadd.f32 %v416, %v417
    %v446 = vadd.f32 %v418, %v419
    %v447 = vadd.f32 %v420, %v421
    %v448 = vadd.f32 %v444, %v445
    %v449 = vadd.f32 %v446, %v447
    %v450 = vadd.f32 %v448, %v449
    %v451 = vadd.f32 %v307, %v436
    %v452 = vadd.f32 %v308, %v443
    %v453 = vadd.f32 %v309, %v450
    %v454 = vld [vmem:[%s0 + $0xc0] sm:$0xff]
    %v455 = vld [vmem:[%s0 + $0xc8] sm:$0xff]
    %v456 = vld [vmem:[%s0 + $0xd0] sm:$0xff]
    %v457 = vld [vmem:[%s0 + $0xd8] sm:$0xff]
    %v458 = vld [vmem:[%s0 + $0xe0] sm:$0xff]
    %v459 = vld [vmem:[%s0 + $0xe8] sm:$0xff]
    %v460 = vld [vmem:[%s0 + $0xf0] sm:$0xff]
    %v461 = vld [vmem:[%s0 + $0xf8] sm:$0xff]
    %v462 = vxor.u32 %v454, 2147483648
    %v463 = vxor.u32 %v455, 2147483648
    %v464 = vxor.u32 %v456, 2147483648
    %v465 = vxor.u32 %v457, 2147483648
    %v466 = vxor.u32 %v458, 2147483648
    %v467 = vxor.u32 %v459, 2147483648
    %v468 = vxor.u32 %v460, 2147483648
    %v469 = vxor.u32 %v461, 2147483648
    %v470 = vmul.f32 %v462, 1.442695
    %v471 = vpow.pop %v470
    %v472 = vmul.f32 %v463, 1.442695
    %v473 = vpow.pop %v472
    %v474 = vmul.f32 %v464, 1.442695
    %v475 = vpow.pop %v474
    %v476 = vmul.f32 %v465, 1.442695
    %v477 = vpow.pop %v476
    %v478 = vmul.f32 %v466, 1.442695
    %v479 = vpow.pop %v478
    %v480 = vmul.f32 %v467, 1.442695
    %v481 = vpow.pop %v480
    %v482 = vmul.f32 %v468, 1.442695
    %v483 = vpow.pop %v482
    %v484 = vmul.f32 %v469, 1.442695
    %v485 = vpow.pop %v484
    %v486 = vadd.f32 %v471, 1.0
    %v487 = vadd.f32 %v473, 1.0
    %v488 = vadd.f32 %v475, 1.0
    %v489 = vadd.f32 %v477, 1.0
    %v490 = vadd.f32 %v479, 1.0
    %v491 = vadd.f32 %v481, 1.0
    %v492 = vadd.f32 %v483, 1.0
    %v493 = vadd.f32 %v485, 1.0
    %v494 = vrcp.pop %v486
    %v495 = vmul.f32 1.0, %v494
    %v496 = vrcp.pop %v487
    %v497 = vmul.f32 1.0, %v496
    %v498 = vrcp.pop %v488
    %v499 = vmul.f32 1.0, %v498
    %v500 = vrcp.pop %v489
    %v501 = vmul.f32 1.0, %v500
    %v502 = vrcp.pop %v490
    %v503 = vmul.f32 1.0, %v502
    %v504 = vrcp.pop %v491
    %v505 = vmul.f32 1.0, %v504
    %v506 = vrcp.pop %v492
    %v507 = vmul.f32 1.0, %v506
    %v508 = vrcp.pop %v493
    %v509 = vmul.f32 1.0, %v508
    %v510 = vld [vmem:[%s1 + $0xc0] sm:$0xff]
    %v511 = vld [vmem:[%s1 + $0xc8] sm:$0xff]
    %v512 = vld [vmem:[%s1 + $0xd0] sm:$0xff]
    %v513 = vld [vmem:[%s1 + $0xd8] sm:$0xff]
    %v514 = vld [vmem:[%s1 + $0xe0] sm:$0xff]
    %v515 = vld [vmem:[%s1 + $0xe8] sm:$0xff]
    %v516 = vld [vmem:[%s1 + $0xf0] sm:$0xff]
    %v517 = vld [vmem:[%s1 + $0xf8] sm:$0xff]
    %518 = vset.pattern.permute.xlu0 0
    %519 = vperm.xlu0 %518, %v510
    %v520 = vpop.permute.xlu0 %519
    %521 = vset.pattern.permute.xlu0 0
    %522 = vperm.xlu0 %521, %v511
    %v523 = vpop.permute.xlu0 %522
    %524 = vset.pattern.permute.xlu0 0
    %525 = vperm.xlu0 %524, %v512
    %v526 = vpop.permute.xlu0 %525
    %527 = vset.pattern.permute.xlu0 0
    %528 = vperm.xlu0 %527, %v513
    %v529 = vpop.permute.xlu0 %528
    %530 = vset.pattern.permute.xlu0 0
    %531 = vperm.xlu0 %530, %v514
    %v532 = vpop.permute.xlu0 %531
    %533 = vset.pattern.permute.xlu0 0
    %534 = vperm.xlu0 %533, %v515
    %v535 = vpop.permute.xlu0 %534
    %536 = vset.pattern.permute.xlu0 0
    %537 = vperm.xlu0 %536, %v516
    %v538 = vpop.permute.xlu0 %537
    %539 = vset.pattern.permute.xlu0 0
    %540 = vperm.xlu0 %539, %v517
    %v541 = vpop.permute.xlu0 %540
    %vm542 = vcmp.eq.s32.totalorder %v77, %v520
    %vm543 = vcmp.eq.s32.totalorder %v77, %v523
    %vm544 = vcmp.eq.s32.totalorder %v77, %v526
    %vm545 = vcmp.eq.s32.totalorder %v77, %v529
    %vm546 = vcmp.eq.s32.totalorder %v77, %v532
    %vm547 = vcmp.eq.s32.totalorder %v77, %v535
    %vm548 = vcmp.eq.s32.totalorder %v77, %v538
    %vm549 = vcmp.eq.s32.totalorder %v77, %v541
    %v550 = vsel %vm542, 1, 0
    %v551 = vsel %vm543, 1, 0
    %v552 = vsel %vm544, 1, 0
    %v553 = vsel %vm545, 1, 0
    %v554 = vsel %vm546, 1, 0
    %v555 = vsel %vm547, 1, 0
    %v556 = vsel %vm548, 1, 0
    %v557 = vsel %vm549, 1, 0
    %v558 = vcvt.s32.f32 %v550
    %v559 = vcvt.s32.f32 %v551
    %v560 = vcvt.s32.f32 %v552
    %v561 = vcvt.s32.f32 %v553
    %v562 = vcvt.s32.f32 %v554
    %v563 = vcvt.s32.f32 %v555
    %v564 = vcvt.s32.f32 %v556
    %v565 = vcvt.s32.f32 %v557
    %v566 = vmul.f32 %v495, %v558
    %v567 = vmul.f32 %v497, %v559
    %v568 = vmul.f32 %v499, %v560
    %v569 = vmul.f32 %v501, %v561
    %v570 = vmul.f32 %v503, %v562
    %v571 = vmul.f32 %v505, %v563
    %v572 = vmul.f32 %v507, %v564
    %v573 = vmul.f32 %v509, %v565
    %v574 = vadd.f32 %v566, %v567
    %v575 = vadd.f32 %v568, %v569
    %v576 = vadd.f32 %v570, %v571
    %v577 = vadd.f32 %v572, %v573
    %v578 = vadd.f32 %v574, %v575
    %v579 = vadd.f32 %v576, %v577
    %v580 = vadd.f32 %v578, %v579
    %v581 = vadd.f32 %v495, %v497
    %v582 = vadd.f32 %v499, %v501
    %v583 = vadd.f32 %v503, %v505
    %v584 = vadd.f32 %v507, %v509
    %v585 = vadd.f32 %v581, %v582
    %v586 = vadd.f32 %v583, %v584
    %v587 = vadd.f32 %v585, %v586
    %v588 = vadd.f32 %v558, %v559
    %v589 = vadd.f32 %v560, %v561
    %v590 = vadd.f32 %v562, %v563
    %v591 = vadd.f32 %v564, %v565
    %v592 = vadd.f32 %v588, %v589
    %v593 = vadd.f32 %v590, %v591
    %v594 = vadd.f32 %v592, %v593
    %v595 = vadd.f32 %v451, %v580
    %v596 = vadd.f32 %v452, %v587
    %v597 = vadd.f32 %v453, %v594
    %v598 = vld [vmem:[#allocation2] sm:$0xff]
    %v599 = vadd.f32 %v598, %v595
    %vm600 = vcmask 64512
    %601 = vst.msk [vmem:[#allocation2] sm:$0xff] %vm600, %v599
    %v602 = vld [vmem:[#allocation3] sm:$0xff]
    %v603 = vadd.f32 %v602, %v596
    %604 = vst.msk [vmem:[#allocation3] sm:$0xff] %vm600, %v603
    %v605 = vld [vmem:[#allocation4] sm:$0xff]
    %v606 = vadd.f32 %v605, %v597
    %607 = vst.msk [vmem:[#allocation4] sm:$0xff] %vm600, %v606
    // Predicated region
    $region14: #{tpu_custom_call.1} parent=1 // pred_check
      %p608 = pneg %p12
    $region15: #{tpu_custom_call.1} parent=1 // pred_check_branch
      %610 = sbr.rel (%p608) target = $region17
    $region16: #{tpu_custom_call.1} parent=1 // pred_region
      %v611 = vld [vmem:[#allocation2] sm:$0xff]
      %v612 = vsel %vm600, %v611, 0.0
      %613 = vadd.xlane.f32.xlu0 %v612
      %v614 = vpop.xlane.xlu0 %613
      %v615 = vrot.slane %v614, 4
      %v616 = vadd.f32 %v614, %v615
      %v617 = vrot.slane %v616, 2
      %v618 = vadd.f32 %v616, %v617
      %v619 = vrot.slane %v618, 1
      %v620 = vadd.f32 %v618, %v619
      %s621 = vtos %v620
      %v622 = vstv %s621
      %v623 = vld [vmem:[#allocation3] sm:$0xff]
      %v624 = vsel %vm600, %v623, 0.0
      %625 = vadd.xlane.f32.xlu0 %v624
      %v626 = vpop.xlane.xlu0 %625
      %v627 = vrot.slane %v626, 4
      %v628 = vadd.f32 %v626, %v627
      %v629 = vrot.slane %v628, 2
      %v630 = vadd.f32 %v628, %v629
      %v631 = vrot.slane %v630, 1
      %v632 = vadd.f32 %v630, %v631
      %s633 = vtos %v632
      %v634 = vstv %s633
      %v635 = vld [vmem:[#allocation4] sm:$0xff]
      %v636 = vsel %vm600, %v635, 0.0
      %637 = vadd.xlane.f32.xlu0 %v636
      %v638 = vpop.xlane.xlu0 %637
      %v639 = vrot.slane %v638, 4
      %v640 = vadd.f32 %v638, %v639
      %v641 = vrot.slane %v640, 2
      %v642 = vadd.f32 %v640, %v641
      %v643 = vrot.slane %v642, 1
      %v644 = vadd.f32 %v642, %v643
      %s645 = vtos %v644
      %v646 = vstv %s645
      %v647 = vsub.f32 %v634, %v622
      %v648 = vsub.f32 %v646, %v622
      %v649 = vadd.f32 %v622, 1.0
      %v650 = vmul.f32 %v647, 0.5
      %v651 = vadd.f32 %v622, %v650
      %v652 = vmul.f32 %v648, 0.5
      %v653 = vadd.f32 %v651, %v652
      %v654 = vadd.f32 %v653, 1.0
      %v655 = vrcp.pop %v654
      %v656 = vmul.f32 %v649, %v655
      %v657 = vsub.f32 1.0, %v656
      %vm658 = vcmask 0
      %659 = vst.msk [vmem:[#allocation5] sm:$0x1] %vm658, %v657
    $region17: #{tpu_custom_call.1} parent=1 // pred_fallthru
      _
    // Predicated region
    $region18: #{tpu_custom_call.1} parent=1 // pred_check
      _
    $region19: #{tpu_custom_call.1} parent=1 // pred_check_branch
      %661 = sbr.rel (0) target = $region21
    $region20: #{tpu_custom_call.1} parent=1 // pred_region
      %s663 = ssub.s32 16, 16
      %664 = vsyncadd [#allocation6], %s663
      %s666 = sshll.u32 [#allocation5], 4
      %s667 = int_to_ptr.vmem [resolvable:$true] %s666
      %669 = dma.vmem_to_hbm [thread:$0]  %s667, 16, %s2, [#allocation6]
    $region21: #{tpu_custom_call.1} parent=1 // pred_fallthru
      _
    // Predicated region
    $region22: #{tpu_custom_call.1} parent=1 // pred_check
      _
    $region23: #{tpu_custom_call.1} parent=1 // pred_check_branch
      %671 = sbr.rel (0) target = $region25
    $region24: #{tpu_custom_call.1} parent=1 // pred_region
      %672 = dma.done [#allocation6], 16
    $region25: #{tpu_custom_call.1} parent=1 // pred_fallthru
      _
    %673 = vsyncpa [#allocation6], 1

</llo_original>
